<compile_context>
chip_gen: v7x
topology: tpu7x:2x2x1
jax: 0.10.0
libtpu: 0.0.40
codegen_flags: <defaults>
</compile_context>

<pallas_src>
import functools

import jax
import jax.numpy as jnp
from jax.experimental import pallas as pl
from jax.experimental.pallas import tpu as pltpu

NUM_FEATURES = 784
NUM_CLASSES = 10

C_PAD = 128            # padded class (lane) dim for the MXU / softmax compute
DEFAULT_TILE_B = 2048  # batch rows per grid step (amortizes ~0.35us per-step overhead)


def _round_up(x, m):
    return ((x + m - 1) // m) * m


def linear_softmax_kernel(x_ref, w_ref, b_ref, logits_ref, probas_ref):
    # x: [tb, 784] (f32 or bf16), w: [784, C_PAD] bf16 (VMEM-resident across grid),
    # b: [1, C_PAD] f32 with padded lanes set to -1e30 (mask folded into bias).
    x = x_ref[...].astype(jnp.bfloat16)                        # free VPU work, mem-bound
    w = w_ref[...]
    b = b_ref[...]
    z = jnp.dot(x, w, preferred_element_type=jnp.float32) + b  # [tb, C_PAD] f32

    # Store only the real classes (narrow, non-padded output).
    logits_ref[...] = z[:, :NUM_CLASSES]

    # Numerically stable softmax over the class axis; padded lanes hold ~-1e30 so they
    # never win the max and exp() underflows them to 0 in the denominator.
    m = jnp.max(z, axis=1, keepdims=True)
    e = jnp.exp(z - m)
    denom = jnp.sum(e, axis=1, keepdims=True)
    probas = e / denom                                         # exact division
    probas_ref[...] = probas[:, :NUM_CLASSES]


def prepare_params(weight, bias):
    """One-time parameter prep (keep outside the per-call hot path).

    weight: [C, F] f32 (PyTorch nn.Linear layout), bias: [C] f32.
    Returns (w_prep [F, C_PAD] bf16, b_prep [1, C_PAD] f32 with -1e30 mask lanes).
    """
    C, F = weight.shape
    w_t = weight.T.astype(jnp.bfloat16)                        # [F, C]
    w_prep = jnp.zeros((F, C_PAD), dtype=jnp.bfloat16)
    w_prep = w_prep.at[:, :C].set(w_t)
    # Padded class lanes get a huge negative bias -> masked out of the softmax.
    b_prep = jnp.full((1, C_PAD), -1e30, dtype=jnp.float32)
    b_prep = b_prep.at[0, :C].set(bias.astype(jnp.float32))
    return w_prep, b_prep


def _vmem_limit_bytes(tb):
    x_tile = 2 * tb * NUM_FEATURES * 4            # double-buffered f32 X tile
    outs = 2 * 2 * tb * NUM_CLASSES * 4           # logits + probas, double-buffered
    w = 2 * NUM_FEATURES * C_PAD * 2              # bf16 weight (resident)
    b = 2 * 8 * C_PAD * 4
    scratch = 6 * tb * C_PAD * 4                  # in-kernel f32 intermediates headroom
    total = x_tile + outs + w + b + scratch + (8 << 20)
    return max(32 << 20, min(total, 48 << 20))    # stay under v7x's 64 MiB physical


@functools.partial(jax.jit, static_argnames=("tile_b",))
def softmax_classifier_forward(x, w_prep, b_prep, *, tile_b=DEFAULT_TILE_B):
    """x: [B, 784] f32 (or bf16), w_prep/b_prep from prepare_params().

    Returns (logits [B, 10] f32, probas [B, 10] f32), matching
    torch.nn.Linear(num_features, num_classes) + torch.softmax(dim=1).
    """
    B, F = x.shape
    assert F == NUM_FEATURES

    # Batch tile: multiple of 8, no bigger than the (rounded) batch, and clamped so
    # moderate batches still produce >= 2 grid steps (both v7x TensorCores busy).
    tb = min(tile_b, _round_up(B, 8))
    if B > 8:
        tb = min(tb, max(8, _round_up((B + 1) // 2, 8)))
    tb = _round_up(tb, 8)
    grid = (pl.cdiv(B, tb),)

    out_shape = (
        jax.ShapeDtypeStruct((B, NUM_CLASSES), jnp.float32),
        jax.ShapeDtypeStruct((B, NUM_CLASSES), jnp.float32),
    )

    logits, probas = pl.pallas_call(
        linear_softmax_kernel,
        out_shape=out_shape,
        grid=grid,
        in_specs=[
            # X: one batch tile per grid step, streamed straight from HBM
            # (784 == full last dim, so no feature padding needed).
            pl.BlockSpec((tb, NUM_FEATURES), lambda i: (i, 0)),
            # Weight & bias: same block every step -> stay VMEM-resident.
            pl.BlockSpec((NUM_FEATURES, C_PAD), lambda i: (0, 0)),
            pl.BlockSpec((1, C_PAD), lambda i: (0, 0)),
        ],
        out_specs=(
            # Narrow outputs: block last dim == full array last dim (10).
            pl.BlockSpec((tb, NUM_CLASSES), lambda i: (i, 0)),
            pl.BlockSpec((tb, NUM_CLASSES), lambda i: (i, 0)),
        ),
        compiler_params=pltpu.CompilerParams(
            # Batch tiles are independent -> parallel (2x on v7x's 2 TensorCores).
            dimension_semantics=("parallel",),
            vmem_limit_bytes=_vmem_limit_bytes(tb),
        ),
    )(x, w_prep, b_prep)

    return logits, probas


if __name__ == "__main__":
    key = jax.random.PRNGKey(0)
    B = 8
    x = jax.random.normal(key, (B, NUM_FEATURES), dtype=jnp.float32)

    # --- Case 1: module as specified (__init__ zeroes weight and bias) ---
    weight = jnp.zeros((NUM_CLASSES, NUM_FEATURES), dtype=jnp.float32)
    bias = jnp.zeros((NUM_CLASSES,), dtype=jnp.float32)
    w_prep, b_prep = prepare_params(weight, bias)

    logits, probas = softmax_classifier_forward(x, w_prep, b_prep)
    jax.block_until_ready((logits, probas))

    ref_logits = x @ weight.T + bias
    ref_probas = jax.nn.softmax(ref_logits, axis=1)
    assert logits.shape == (B, NUM_CLASSES) and probas.shape == (B, NUM_CLASSES)
    assert jnp.allclose(logits, ref_logits, atol=1e-5)
    assert jnp.allclose(probas, ref_probas, atol=1e-5)

    # --- Case 2: non-trivial parameters (trained-weights semantics check) ---
    kw, kb = jax.random.split(jax.random.PRNGKey(1))
    weight2 = 0.05 * jax.random.normal(kw, (NUM_CLASSES, NUM_FEATURES), dtype=jnp.float32)
    bias2 = 0.1 * jax.random.normal(kb, (NUM_CLASSES,), dtype=jnp.float32)
    w_prep2, b_prep2 = prepare_params(weight2, bias2)

    logits2, probas2 = softmax_classifier_forward(x, w_prep2, b_prep2)
    jax.block_until_ready((logits2, probas2))

    # Reference with the same bf16 casting the kernel uses (f32 accumulation).
    x_bf = x.astype(jnp.bfloat16).astype(jnp.float32)
    w_bf = weight2.astype(jnp.bfloat16).astype(jnp.float32)
    ref_logits2 = x_bf @ w_bf.T + bias2
    ref_probas2 = jax.nn.softmax(ref_logits2, axis=1)
    assert jnp.allclose(logits2, ref_logits2, atol=2e-3, rtol=2e-3)
    assert jnp.allclose(probas2, ref_probas2, atol=2e-3)
    assert jnp.allclose(jnp.sum(probas2, axis=1), 1.0, atol=1e-3)

    print("KERNEL_OK")
</pallas_src>

<mosaic_0001>
module attributes {stable_mosaic.version = 11 : i64} {
  func.func @linear_softmax_kernel(%arg0: i32, %arg1: memref<8x784xf32, #tpu.memory_space<vmem>>, %arg2: memref<784x128xbf16, #tpu.memory_space<vmem>>, %arg3: memref<1x128xf32, #tpu.memory_space<vmem>>, %arg4: memref<8x10xf32, #tpu.memory_space<vmem>>, %arg5: memref<8x10xf32, #tpu.memory_space<vmem>>) attributes {dimension_semantics = [#tpu.dimension_semantics<parallel>], iteration_bounds = array<i64: 1>, scalar_prefetch = 0 : i64, scratch_operands = 0 : i64, tpu.core_type = #tpu.core_type<tc>, window_params = [{transform_indices = @transform_0, window_bounds = array<i64: 8, 784>}, {pipeline_mode = #tpu.pipeline_mode<synchronous>, transform_indices = @transform_1, window_bounds = array<i64: 784, 128>}, {pipeline_mode = #tpu.pipeline_mode<synchronous>, transform_indices = @transform_2, window_bounds = array<i64: 1, 128>}, {transform_indices = @transform_3, window_bounds = array<i64: 8, 10>}, {transform_indices = @transform_4, window_bounds = array<i64: 8, 10>}]} {
    %c0 = arith.constant 0 : index
    %c0_0 = arith.constant 0 : index
    %0 = vector.load %arg1[%c0, %c0_0] : memref<8x784xf32, #tpu.memory_space<vmem>>, vector<8x784xf32>
    %1 = arith.truncf %0 : vector<8x784xf32> to vector<8x784xbf16>
    %c0_1 = arith.constant 0 : index
    %c0_2 = arith.constant 0 : index
    %2 = vector.load %arg2[%c0_1, %c0_2] : memref<784x128xbf16, #tpu.memory_space<vmem>>, vector<784x128xbf16>
    %c0_3 = arith.constant 0 : index
    %c0_4 = arith.constant 0 : index
    %3 = vector.load %arg3[%c0_3, %c0_4] : memref<1x128xf32, #tpu.memory_space<vmem>>, vector<1x128xf32>
    %cst = arith.constant dense<0.000000e+00> : vector<8x128xf32>
    %4 = tpu.matmul %1, %2, %cst {dimension_numbers = #tpu.dot_dimension_numbers<[1], [0], [0], [1], [0, 0, 1, 1], [], []>} : vector<8x784xbf16>, vector<784x128xbf16>, vector<8x128xf32> -> vector<8x128xf32>
    %5 = vector.broadcast %3 : vector<1x128xf32> to vector<8x128xf32>
    %6 = arith.addf %4, %5 : vector<8x128xf32>
    %7 = vector.extract_strided_slice %6 {offsets = [0, 0], sizes = [8, 10], strides = [1, 1]} : vector<8x128xf32> to vector<8x10xf32>
    %c0_5 = arith.constant 0 : index
    %c0_6 = arith.constant 0 : index
    %8 = vector.load %arg4[%c0_5, %c0_6] : memref<8x10xf32, #tpu.memory_space<vmem>>, vector<8x10xf32>
    tpu.vector_store %arg4[%c0_5, %c0_6], %7 {strides = array<i32>} : memref<8x10xf32, #tpu.memory_space<vmem>>, vector<8x10xf32>,
    %cst_7 = arith.constant dense<0xFF800000> : vector<8xf32>
    %9 = vector.multi_reduction <maximumf>, %6, %cst_7 [1] : vector<8x128xf32> to vector<8xf32>
    %10 = vector.shape_cast %9 : vector<8xf32> to vector<8x1xf32>
    %11 = vector.broadcast %10 : vector<8x1xf32> to vector<8x128xf32>
    %12 = arith.subf %6, %11 : vector<8x128xf32>
    %13 = math.exp %12 : vector<8x128xf32>
    %cst_8 = arith.constant dense<0.000000e+00> : vector<8xf32>
    %14 = vector.multi_reduction <add>, %13, %cst_8 [1] : vector<8x128xf32> to vector<8xf32>
    %15 = vector.shape_cast %14 : vector<8xf32> to vector<8x1xf32>
    %16 = vector.broadcast %15 : vector<8x1xf32> to vector<8x128xf32>
    %17 = arith.divf %13, %16 : vector<8x128xf32>
    %18 = vector.extract_strided_slice %17 {offsets = [0, 0], sizes = [8, 10], strides = [1, 1]} : vector<8x128xf32> to vector<8x10xf32>
    %c0_9 = arith.constant 0 : index
    %c0_10 = arith.constant 0 : index
    %19 = vector.load %arg5[%c0_9, %c0_10] : memref<8x10xf32, #tpu.memory_space<vmem>>, vector<8x10xf32>
    tpu.vector_store %arg5[%c0_9, %c0_10], %18 {strides = array<i32>} : memref<8x10xf32, #tpu.memory_space<vmem>>, vector<8x10xf32>,
    return
  }
  func.func @transform_0(%arg0: i32) -> (i32, i32) {
    %c0_i32 = arith.constant 0 : i32
    %c0_i32_0 = arith.constant 0 : i32
    return %arg0, %c0_i32 : i32, i32
  }
  func.func @transform_1(%arg0: i32) -> (i32, i32) {
    %c0_i32 = arith.constant 0 : i32
    %c0_i32_0 = arith.constant 0 : i32
    %c0_i32_1 = arith.constant 0 : i32
    return %c0_i32, %c0_i32_0 : i32, i32
  }
  func.func @transform_2(%arg0: i32) -> (i32, i32) {
    %c0_i32 = arith.constant 0 : i32
    %c0_i32_0 = arith.constant 0 : i32
    %c0_i32_1 = arith.constant 0 : i32
    return %c0_i32, %c0_i32_0 : i32, i32
  }
  func.func @transform_3(%arg0: i32) -> (i32, i32) {
    %c0_i32 = arith.constant 0 : i32
    %c0_i32_0 = arith.constant 0 : i32
    return %arg0, %c0_i32 : i32, i32
  }
  func.func @transform_4(%arg0: i32) -> (i32, i32) {
    %c0_i32 = arith.constant 0 : i32
    %c0_i32_0 = arith.constant 0 : i32
    return %arg0, %c0_i32 : i32, i32
  }
}

</mosaic_0001>

<llo_original>
// kernel: softmax_classifier_forward.1
$region0: #{softmax_classifier_forward.1}
  #allocation0 [shape = 'u32[]', space=smem, size = 0x4, offset = 0x4, fixed_abs, tag = 'smem constant byte address 0x4 - core index']
  #allocation1 [shape = 'u32[144,128]{1,0:T(1,128)}', space=vmem, size = 0x12000, scoped, tag = 'internal scratch']
  %s0 = inlined_call_operand.hbm [shape: f32[8,784], index: 0, kind: input, shape index: {}]
  %s1 = inlined_call_operand.hbm [shape: bf16[784,128], index: 1, kind: input, shape index: {}]
  %s2 = inlined_call_operand.vmem [shape: f32[1,128], index: 2, kind: input, shape index: {}]
  %s3 = inlined_call_operand.hbm [shape: f32[8,10], index: 3, kind: output, shape index: {0}]
  %s4 = inlined_call_operand.hbm [shape: f32[8,10], index: 4, kind: output, shape index: {1}]
  %5 = xla_tuple %s3, %s4
  %s6 = sld [smem:[#allocation0]]
  $region38: #{softmax_classifier_forward.1} parent=0
    _
  %s8 = ssub.s32 1, %s6
  %s9 = scalar_select 0, %s8, %s6
  $region1: #{softmax_classifier_forward.1} parent=0
    #allocation2 [shape = 'u8[28672]{0}', space=vmem, size = 0x7000, scoped, tag = 'input window, operand 0, single buffered']
    #allocation3 [shape = 's32[1]{0}', space=sflag, size = 0x4, scoped, tag = 'scoped memory for softmax_classifier_forward.1']
    #allocation4 [shape = 's32[1]{0}', space=sflag, size = 0x4, scoped, tag = 'scoped memory for softmax_classifier_forward.1']
    #allocation5 [shape = 'u8[200704]{0}', space=vmem, size = 0x31000, scoped, tag = 'input window, operand 1, single buffered']
    #allocation6 [shape = 's32[1]{0}', space=sflag, size = 0x4, scoped, tag = 'scoped memory for softmax_classifier_forward.1']
    #allocation7 [shape = 'u8[4096]{0}', space=vmem, size = 0x1000, scoped, tag = 'output window, operand 0, single buffered']
    #allocation8 [shape = 'u8[4096]{0}', space=vmem, size = 0x1000, scoped, tag = 'output window, operand 1, single buffered']
    #allocation9 [shape = 's32[1]{0}', space=sflag, size = 0x4, scoped, tag = 'scoped memory for softmax_classifier_forward.1']
    %10 = vsyncpa [#allocation3], 0
    %11 = vsyncpa [#allocation6], 0
    %12 = vsyncpa [#allocation4], 0
    %13 = vsyncpa [#allocation9], 0
    // Predicated region
    $region2: #{softmax_classifier_forward.1} parent=1 // pred_check
      _
    $region3: #{softmax_classifier_forward.1} parent=1 // pred_check_branch
      %15 = sbr.rel (0) target = $region5
    $region4: #{softmax_classifier_forward.1} parent=1 // pred_region
      %s17 = ssub.s32 896, 896
      %18 = vsyncadd [#allocation3], %s17
      %s20 = sshll.u32 [#allocation2], 4
      %s21 = int_to_ptr.vmem [resolvable:$true] %s20
      %23 = dma.hbm_to_vmem [thread:$0]  %s0, 896, %s21, [#allocation3]
    $region5: #{softmax_classifier_forward.1} parent=1 // pred_fallthru
      _
    // Predicated region
    $region6: #{softmax_classifier_forward.1} parent=1 // pred_check
      _
    $region7: #{softmax_classifier_forward.1} parent=1 // pred_check_branch
      %25 = sbr.rel (0) target = $region9
    $region8: #{softmax_classifier_forward.1} parent=1 // pred_region
      %s27 = ssub.s32 6272, 6272
      %28 = vsyncadd [#allocation6], %s27
      %s29 = sshll.u32 [#allocation5], 4
      %s30 = int_to_ptr.vmem [resolvable:$true] %s29
      %35 = dma.hbm_to_vmem [thread:$0]  %s1, 6272, %s30, [#allocation6], 64, 64, 4
    $region9: #{softmax_classifier_forward.1} parent=1 // pred_fallthru
      _
    // Predicated region
    $region10: #{softmax_classifier_forward.1} parent=1 // pred_check
      _
    $region11: #{softmax_classifier_forward.1} parent=1 // pred_check_branch
      %37 = sbr.rel (0) target = $region13
    $region12: #{softmax_classifier_forward.1} parent=1 // pred_region
      _
    $region13: #{softmax_classifier_forward.1} parent=1 // pred_fallthru
      _
    // Predicated region
    $region14: #{softmax_classifier_forward.1} parent=1 // pred_check
      _
    $region15: #{softmax_classifier_forward.1} parent=1 // pred_check_branch
      %39 = sbr.rel (0) target = $region17
    $region16: #{softmax_classifier_forward.1} parent=1 // pred_region
      %40 = dma.done [#allocation3], 896
    $region17: #{softmax_classifier_forward.1} parent=1 // pred_fallthru
      _
    // Predicated region
    $region18: #{softmax_classifier_forward.1} parent=1 // pred_check
      _
    $region19: #{softmax_classifier_forward.1} parent=1 // pred_check_branch
      %42 = sbr.rel (0) target = $region21
    $region20: #{softmax_classifier_forward.1} parent=1 // pred_region
      %43 = dma.done [#allocation6], 6272
    $region21: #{softmax_classifier_forward.1} parent=1 // pred_fallthru
      _
    %v45 = vld [vmem:[#allocation2] sm:$0xff]
    %v46 = vld [vmem:[#allocation2 + $0x8] sm:$0xff]
    %v47 = vld [vmem:[#allocation2 + $0x10] sm:$0xff]
    %v48 = vld [vmem:[#allocation2 + $0x18] sm:$0xff]
    %v49 = vld [vmem:[#allocation2 + $0x20] sm:$0xff]
    %v50 = vld [vmem:[#allocation2 + $0x28] sm:$0xff]
    %v51 = vld [vmem:[#allocation2 + $0x30] sm:$0xff]
    %v52 = vpack.c.bf16 %v45, %v45
    %v53 = vpack.c.bf16 %v46, %v46
    %v54 = vpack.c.bf16 %v47, %v47
    %v55 = vpack.c.bf16 %v48, %v48
    %v56 = vpack.c.bf16 %v49, %v49
    %v57 = vpack.c.bf16 %v50, %v50
    %v58 = vpack.c.bf16 %v51, %v51
    %v59 = vld [vmem:[#allocation5] sm:$0xf]
    %v60 = vld [vmem:[#allocation5 + $0x4] sm:$0xf]
    %v61 = vld [vmem:[#allocation5 + $0x8] sm:$0xf]
    %v62 = vld [vmem:[#allocation5 + $0xc] sm:$0xf]
    %v63 = vld [vmem:[#allocation5 + $0x10] sm:$0xf]
    %v64 = vld [vmem:[#allocation5 + $0x14] sm:$0xf]
    %v65 = vld [vmem:[#allocation5 + $0x18] sm:$0xf]
    %v66 = vld [vmem:[#allocation5 + $0x1c] sm:$0xf]
    %v67 = vld [vmem:[#allocation5 + $0x20] sm:$0xf]
    %v68 = vld [vmem:[#allocation5 + $0x24] sm:$0xf]
    %v69 = vld [vmem:[#allocation5 + $0x28] sm:$0xf]
    %v70 = vld [vmem:[#allocation5 + $0x2c] sm:$0xf]
    %v71 = vld [vmem:[#allocation5 + $0x30] sm:$0xf]
    %v72 = vld [vmem:[#allocation5 + $0x34] sm:$0xf]
    %v73 = vld [vmem:[#allocation5 + $0x38] sm:$0xf]
    %v74 = vld [vmem:[#allocation5 + $0x3c] sm:$0xf]
    %v75 = vld [vmem:[#allocation5 + $0x40] sm:$0xf]
    %v76 = vld [vmem:[#allocation5 + $0x44] sm:$0xf]
    %v77 = vld [vmem:[#allocation5 + $0x48] sm:$0xf]
    %v78 = vld [vmem:[#allocation5 + $0x4c] sm:$0xf]
    %v79 = vld [vmem:[#allocation5 + $0x50] sm:$0xf]
    %v80 = vld [vmem:[#allocation5 + $0x54] sm:$0xf]
    %v81 = vld [vmem:[#allocation5 + $0x58] sm:$0xf]
    %v82 = vld [vmem:[#allocation5 + $0x5c] sm:$0xf]
    %v83 = vld [vmem:[#allocation5 + $0x60] sm:$0xf]
    %v84 = vld [vmem:[#allocation5 + $0x64] sm:$0xf]
    %v85 = vld [vmem:[#allocation5 + $0x68] sm:$0xf]
    %v86 = vld [vmem:[#allocation5 + $0x6c] sm:$0xf]
    %v87 = vld [vmem:[#allocation5 + $0x70] sm:$0xf]
    %v88 = vld [vmem:[#allocation5 + $0x74] sm:$0xf]
    %v89 = vld [vmem:[#allocation5 + $0x78] sm:$0xf]
    %v90 = vld [vmem:[#allocation5 + $0x7c] sm:$0xf]
    %v91 = vld [vmem:[#allocation5 + $0x80] sm:$0xf]
    %v92 = vld [vmem:[#allocation5 + $0x84] sm:$0xf]
    %v93 = vld [vmem:[#allocation5 + $0x88] sm:$0xf]
    %v94 = vld [vmem:[#allocation5 + $0x8c] sm:$0xf]
    %v95 = vld [vmem:[#allocation5 + $0x90] sm:$0xf]
    %v96 = vld [vmem:[#allocation5 + $0x94] sm:$0xf]
    %v97 = vld [vmem:[#allocation5 + $0x98] sm:$0xf]
    %v98 = vld [vmem:[#allocation5 + $0x9c] sm:$0xf]
    %v99 = vld [vmem:[#allocation5 + $0xa0] sm:$0xf]
    %v100 = vld [vmem:[#allocation5 + $0xa4] sm:$0xf]
    %v101 = vld [vmem:[#allocation5 + $0xa8] sm:$0xf]
    %v102 = vld [vmem:[#allocation5 + $0xac] sm:$0xf]
    %v103 = vld [vmem:[#allocation5 + $0xb0] sm:$0xf]
    %v104 = vld [vmem:[#allocation5 + $0xb4] sm:$0xf]
    %v105 = vld [vmem:[#allocation5 + $0xb8] sm:$0xf]
    %v106 = vld [vmem:[#allocation5 + $0xbc] sm:$0xf]
    %v107 = vld [vmem:[#allocation5 + $0xc0] sm:$0xf]
    %v108 = vld [vmem:[#allocation5 + $0xc4] sm:$0xf]
    %v109 = vld [vmem:[#allocation5 + $0xc8] sm:$0xf]
    %v110 = vld [vmem:[#allocation5 + $0xcc] sm:$0xf]
    %v111 = vld [vmem:[#allocation5 + $0xd0] sm:$0xf]
    %v112 = vld [vmem:[#allocation5 + $0xd4] sm:$0xf]
    %v113 = vld [vmem:[#allocation5 + $0xd8] sm:$0xf]
    %v114 = vld [vmem:[#allocation5 + $0xdc] sm:$0xf]
    %v115 = vld [vmem:[#allocation5 + $0xe0] sm:$0xf]
    %v116 = vld [vmem:[#allocation5 + $0xe4] sm:$0xf]
    %v117 = vld [vmem:[#allocation5 + $0xe8] sm:$0xf]
    %v118 = vld [vmem:[#allocation5 + $0xec] sm:$0xf]
    %v119 = vld [vmem:[#allocation5 + $0xf0] sm:$0xf]
    %v120 = vld [vmem:[#allocation5 + $0xf4] sm:$0xf]
    %v121 = vld [vmem:[#allocation5 + $0xf8] sm:$0xf]
    %v122 = vld [vmem:[#allocation5 + $0xfc] sm:$0xf]
    %v123 = vld [vmem:[#allocation5 + $0x100] sm:$0xf]
    %v124 = vld [vmem:[#allocation5 + $0x104] sm:$0xf]
    %v125 = vld [vmem:[#allocation5 + $0x108] sm:$0xf]
    %v126 = vld [vmem:[#allocation5 + $0x10c] sm:$0xf]
    %v127 = vld [vmem:[#allocation5 + $0x110] sm:$0xf]
    %v128 = vld [vmem:[#allocation5 + $0x114] sm:$0xf]
    %v129 = vld [vmem:[#allocation5 + $0x118] sm:$0xf]
    %v130 = vld [vmem:[#allocation5 + $0x11c] sm:$0xf]
    %v131 = vld [vmem:[#allocation5 + $0x120] sm:$0xf]
    %v132 = vld [vmem:[#allocation5 + $0x124] sm:$0xf]
    %v133 = vld [vmem:[#allocation5 + $0x128] sm:$0xf]
    %v134 = vld [vmem:[#allocation5 + $0x12c] sm:$0xf]
    %v135 = vld [vmem:[#allocation5 + $0x130] sm:$0xf]
    %v136 = vld [vmem:[#allocation5 + $0x134] sm:$0xf]
    %v137 = vld [vmem:[#allocation5 + $0x138] sm:$0xf]
    %v138 = vld [vmem:[#allocation5 + $0x13c] sm:$0xf]
    %v139 = vld [vmem:[#allocation5 + $0x140] sm:$0xf]
    %v140 = vld [vmem:[#allocation5 + $0x144] sm:$0xf]
    %v141 = vld [vmem:[#allocation5 + $0x148] sm:$0xf]
    %v142 = vld [vmem:[#allocation5 + $0x14c] sm:$0xf]
    %v143 = vld [vmem:[#allocation5 + $0x150] sm:$0xf]
    %v144 = vld [vmem:[#allocation5 + $0x154] sm:$0xf]
    %v145 = vld [vmem:[#allocation5 + $0x158] sm:$0xf]
    %v146 = vld [vmem:[#allocation5 + $0x15c] sm:$0xf]
    %v147 = vld [vmem:[#allocation5 + $0x160] sm:$0xf]
    %v148 = vld [vmem:[#allocation5 + $0x164] sm:$0xf]
    %v149 = vld [vmem:[#allocation5 + $0x168] sm:$0xf]
    %v150 = vld [vmem:[#allocation5 + $0x16c] sm:$0xf]
    %v151 = vld [vmem:[#allocation5 + $0x170] sm:$0xf]
    %v152 = vld [vmem:[#allocation5 + $0x174] sm:$0xf]
    %v153 = vld [vmem:[#allocation5 + $0x178] sm:$0xf]
    %v154 = vld [vmem:[#allocation5 + $0x17c] sm:$0xf]
    %v155 = vld [vmem:[#allocation5 + $0x180] sm:$0xf]
    %v156 = vld [vmem:[#allocation5 + $0x184] sm:$0xf]
    %v157 = vld [vmem:[%s2] sm:$0x1]
    %v159 = vlaneseq
    %v160 = vshrl.u32 %v159, 7
    %v161 = vsub.s32 0, %v160
    %v162 = vrot.slane %v157, %v161
    %v262 = vunpack.c.l.b16 %v59
    %v263 = vunpack.c.l.b16 %v60
    %v264 = vunpack.c.l.b16 %v61
    %v265 = vunpack.c.l.b16 %v62
    %v266 = vunpack.c.l.b16 %v63
    %v267 = vunpack.c.l.b16 %v64
    %v268 = vunpack.c.l.b16 %v65
    %v269 = vunpack.c.l.b16 %v66
    %v270 = vunpack.c.l.b16 %v67
    %v271 = vunpack.c.l.b16 %v68
    %v272 = vunpack.c.l.b16 %v69
    %v273 = vunpack.c.l.b16 %v70
    %v274 = vunpack.c.l.b16 %v71
    %v275 = vunpack.c.l.b16 %v72
    %v276 = vunpack.c.l.b16 %v73
    %v277 = vunpack.c.l.b16 %v74
    %v278 = vunpack.c.l.b16 %v75
    %v279 = vunpack.c.l.b16 %v76
    %v280 = vunpack.c.l.b16 %v77
    %v281 = vunpack.c.l.b16 %v78
    %v282 = vunpack.c.l.b16 %v79
    %v283 = vunpack.c.l.b16 %v80
    %v284 = vunpack.c.l.b16 %v81
    %v285 = vunpack.c.l.b16 %v82
    %v286 = vunpack.c.l.b16 %v83
    %v287 = vunpack.c.l.b16 %v84
    %v288 = vunpack.c.l.b16 %v85
    %v289 = vunpack.c.l.b16 %v86
    %v290 = vunpack.c.l.b16 %v87
    %v291 = vunpack.c.l.b16 %v88
    %v292 = vunpack.c.l.b16 %v89
    %v293 = vunpack.c.l.b16 %v90
    %v294 = vunpack.c.l.b16 %v91
    %v295 = vunpack.c.l.b16 %v92
    %v296 = vunpack.c.l.b16 %v93
    %v297 = vunpack.c.l.b16 %v94
    %v298 = vunpack.c.l.b16 %v95
    %v299 = vunpack.c.l.b16 %v96
    %v300 = vunpack.c.l.b16 %v97
    %v301 = vunpack.c.l.b16 %v98
    %v302 = vunpack.c.l.b16 %v99
    %v303 = vunpack.c.l.b16 %v100
    %v304 = vunpack.c.l.b16 %v101
    %v305 = vunpack.c.l.b16 %v102
    %v306 = vunpack.c.l.b16 %v103
    %v307 = vunpack.c.l.b16 %v104
    %v308 = vunpack.c.l.b16 %v105
    %v309 = vunpack.c.l.b16 %v106
    %v310 = vunpack.c.l.b16 %v107
    %v311 = vunpack.c.l.b16 %v108
    %v312 = vunpack.c.l.b16 %v109
    %v313 = vunpack.c.l.b16 %v110
    %v314 = vunpack.c.l.b16 %v111
    %v315 = vunpack.c.l.b16 %v112
    %v316 = vunpack.c.l.b16 %v113
    %v317 = vunpack.c.l.b16 %v114
    %v318 = vunpack.c.l.b16 %v115
    %v319 = vunpack.c.l.b16 %v116
    %v320 = vunpack.c.l.b16 %v117
    %v321 = vunpack.c.l.b16 %v118
    %v322 = vunpack.c.l.b16 %v119
    %v323 = vunpack.c.l.b16 %v120
    %v324 = vunpack.c.l.b16 %v121
    %v325 = vunpack.c.l.b16 %v122
    %v326 = vunpack.c.l.b16 %v123
    %v327 = vunpack.c.l.b16 %v124
    %v328 = vunpack.c.l.b16 %v125
    %v329 = vunpack.c.l.b16 %v126
    %v330 = vunpack.c.l.b16 %v127
    %v331 = vunpack.c.l.b16 %v128
    %v332 = vunpack.c.l.b16 %v129
    %v333 = vunpack.c.l.b16 %v130
    %v334 = vunpack.c.l.b16 %v131
    %v335 = vunpack.c.l.b16 %v132
    %v336 = vunpack.c.l.b16 %v133
    %v337 = vunpack.c.l.b16 %v134
    %v338 = vunpack.c.l.b16 %v135
    %v339 = vunpack.c.l.b16 %v136
    %v340 = vunpack.c.l.b16 %v137
    %v341 = vunpack.c.l.b16 %v138
    %v342 = vunpack.c.l.b16 %v139
    %v343 = vunpack.c.l.b16 %v140
    %v344 = vunpack.c.l.b16 %v141
    %v345 = vunpack.c.l.b16 %v142
    %v346 = vunpack.c.l.b16 %v143
    %v347 = vunpack.c.l.b16 %v144
    %v348 = vunpack.c.l.b16 %v145
    %v349 = vunpack.c.l.b16 %v146
    %v350 = vunpack.c.l.b16 %v147
    %v351 = vunpack.c.l.b16 %v148
    %v352 = vunpack.c.l.b16 %v149
    %v353 = vunpack.c.l.b16 %v150
    %v354 = vunpack.c.l.b16 %v151
    %v355 = vunpack.c.l.b16 %v152
    %v356 = vunpack.c.l.b16 %v153
    %v357 = vunpack.c.l.b16 %v154
    %v358 = vunpack.c.l.b16 %v155
    %v359 = vunpack.c.l.b16 %v156
    %v360 = vpack.c.b16 %v263, %v262
    %v361 = vpack.c.b16 %v265, %v264
    %v362 = vpack.c.b16 %v267, %v266
    %v363 = vpack.c.b16 %v269, %v268
    %v364 = vpack.c.b16 %v271, %v270
    %v365 = vpack.c.b16 %v273, %v272
    %v366 = vpack.c.b16 %v275, %v274
    %v367 = vpack.c.b16 %v277, %v276
    %v368 = vpack.c.b16 %v279, %v278
    %v369 = vpack.c.b16 %v281, %v280
    %v370 = vpack.c.b16 %v283, %v282
    %v371 = vpack.c.b16 %v285, %v284
    %v372 = vpack.c.b16 %v287, %v286
    %v373 = vpack.c.b16 %v289, %v288
    %v374 = vpack.c.b16 %v291, %v290
    %v375 = vpack.c.b16 %v293, %v292
    %v376 = vpack.c.b16 %v295, %v294
    %v377 = vpack.c.b16 %v297, %v296
    %v378 = vpack.c.b16 %v299, %v298
    %v379 = vpack.c.b16 %v301, %v300
    %v380 = vpack.c.b16 %v303, %v302
    %v381 = vpack.c.b16 %v305, %v304
    %v382 = vpack.c.b16 %v307, %v306
    %v383 = vpack.c.b16 %v309, %v308
    %v384 = vpack.c.b16 %v311, %v310
    %v385 = vpack.c.b16 %v313, %v312
    %v386 = vpack.c.b16 %v315, %v314
    %v387 = vpack.c.b16 %v317, %v316
    %v388 = vpack.c.b16 %v319, %v318
    %v389 = vpack.c.b16 %v321, %v320
    %v390 = vpack.c.b16 %v323, %v322
    %v391 = vpack.c.b16 %v325, %v324
    %v392 = vpack.c.b16 %v327, %v326
    %v393 = vpack.c.b16 %v329, %v328
    %v394 = vpack.c.b16 %v331, %v330
    %v395 = vpack.c.b16 %v333, %v332
    %v396 = vpack.c.b16 %v335, %v334
    %v397 = vpack.c.b16 %v337, %v336
    %v398 = vpack.c.b16 %v339, %v338
    %v399 = vpack.c.b16 %v341, %v340
    %v400 = vpack.c.b16 %v343, %v342
    %v401 = vpack.c.b16 %v345, %v344
    %v402 = vpack.c.b16 %v347, %v346
    %v403 = vpack.c.b16 %v349, %v348
    %v404 = vpack.c.b16 %v351, %v350
    %v405 = vpack.c.b16 %v353, %v352
    %v406 = vpack.c.b16 %v355, %v354
    %v407 = vpack.c.b16 %v357, %v356
    %v408 = vpack.c.b16 %v359, %v358
    %vm458 = vcmask 130048
    %v460 = vsel %vm458, %v58, 0
    %462 = vmatprep.subr.bf16.mxu0 0
    %463 = vmatpush1.bf16.msra.mxu0 %v360
    %464 = vmatprep.subr.bf16.mxu0 0
    %465 = vmatpush1.bf16.msra.mxu0 %v361
    %466 = vmatprep.subr.bf16.mxu0 0
    %467 = vmatpush1.bf16.msra.mxu0 %v362
    %468 = vmatprep.subr.bf16.mxu0 0
    %469 = vmatpush1.bf16.msra.mxu0 %v363
    %470 = vmatprep.subr.bf16.mxu0 0
    %471 = vmatpush1.bf16.msra.mxu0 %v364
    %472 = vmatprep.subr.bf16.mxu0 0
    %473 = vmatpush1.bf16.msra.mxu0 %v365
    %474 = vmatprep.subr.bf16.mxu0 0
    %475 = vmatpush1.bf16.msra.mxu0 %v366
    %476 = vmatprep.subr.bf16.mxu0 0
    %477 = vmatpush1.bf16.msra.mxu0 %v367
    %478 = vmatprep.subr.bf16.mxu0 0
    %479 = vmatpush1.bf16.msra.mxu0 %v368
    %480 = vmatprep.subr.bf16.mxu0 0
    %481 = vmatpush1.bf16.msra.mxu0 %v369
    %482 = vmatprep.subr.bf16.mxu0 0
    %483 = vmatpush1.bf16.msra.mxu0 %v370
    %484 = vmatprep.subr.bf16.mxu0 0
    %485 = vmatpush1.bf16.msra.mxu0 %v371
    %486 = vmatprep.subr.bf16.mxu0 0
    %487 = vmatpush1.bf16.msra.mxu0 %v372
    %488 = vmatprep.subr.bf16.mxu0 0
    %489 = vmatpush1.bf16.msra.mxu0 %v373
    %490 = vmatprep.subr.bf16.mxu0 0
    %491 = vmatpush1.bf16.msra.mxu0 %v374
    %492 = vmatprep.subr.bf16.mxu0 0
    %493 = vmatpush1.bf16.msra.mxu0 %v375
    %494 = vmatprep.mubr.bf16.mxu0 %v53
    %495 = vmatmul.mubr.bf16.gmra.mrb[0].mxu0 %v52
    %v496 = vpop.f32.mrb[0].mxu0
    %v497 = vadd.f32 %v162, %v496
    %v498 = vpop.f32.mrb[0].mxu0
    %v499 = vpop.f32.mrb[0].mxu0
    %v500 = vpop.f32.mrb[0].mxu0
    %501 = vdwg.mxu0
    %502 = vmatprep.subr.bf16.mxu0 0
    %503 = vmatpush1.bf16.msra.mxu0 %v376
    %504 = vmatprep.subr.bf16.mxu0 0
    %505 = vmatpush1.bf16.msra.mxu0 %v377
    %506 = vmatprep.subr.bf16.mxu0 0
    %507 = vmatpush1.bf16.msra.mxu0 %v378
    %508 = vmatprep.subr.bf16.mxu0 0
    %509 = vmatpush1.bf16.msra.mxu0 %v379
    %510 = vmatprep.subr.bf16.mxu0 0
    %511 = vmatpush1.bf16.msra.mxu0 %v380
    %512 = vmatprep.subr.bf16.mxu0 0
    %513 = vmatpush1.bf16.msra.mxu0 %v381
    %514 = vmatprep.subr.bf16.mxu0 0
    %515 = vmatpush1.bf16.msra.mxu0 %v382
    %516 = vmatprep.subr.bf16.mxu0 0
    %517 = vmatpush1.bf16.msra.mxu0 %v383
    %518 = vmatprep.subr.bf16.mxu0 0
    %519 = vmatpush1.bf16.msra.mxu0 %v384
    %520 = vmatprep.subr.bf16.mxu0 0
    %521 = vmatpush1.bf16.msra.mxu0 %v385
    %522 = vmatprep.subr.bf16.mxu0 0
    %523 = vmatpush1.bf16.msra.mxu0 %v386
    %524 = vmatprep.subr.bf16.mxu0 0
    %525 = vmatpush1.bf16.msra.mxu0 %v387
    %526 = vmatprep.subr.bf16.mxu0 0
    %527 = vmatpush1.bf16.msra.mxu0 %v388
    %528 = vmatprep.subr.bf16.mxu0 0
    %529 = vmatpush1.bf16.msra.mxu0 %v389
    %530 = vmatprep.subr.bf16.mxu0 0
    %531 = vmatpush1.bf16.msra.mxu0 %v390
    %532 = vmatprep.subr.bf16.mxu0 0
    %533 = vmatpush1.bf16.msra.mxu0 %v391
    %534 = vmatprep.mubr.bf16.mxu0 %v55
    %535 = vmatmul.mubr.bf16.gmra.mrb[0].mxu0 %v54
    %v536 = vpop.f32.mrb[0].mxu0
    %v537 = vadd.f32 %v497, %v536
    %v538 = vpop.f32.mrb[0].mxu0
    %v539 = vpop.f32.mrb[0].mxu0
    %v540 = vpop.f32.mrb[0].mxu0
    %541 = vdwg.mxu0
    %542 = vmatprep.subr.bf16.mxu0 0
    %543 = vmatpush1.bf16.msra.mxu0 %v392
    %544 = vmatprep.subr.bf16.mxu0 0
    %545 = vmatpush1.bf16.msra.mxu0 %v393
    %546 = vmatprep.subr.bf16.mxu0 0
    %547 = vmatpush1.bf16.msra.mxu0 %v394
    %548 = vmatprep.subr.bf16.mxu0 0
    %549 = vmatpush1.bf16.msra.mxu0 %v395
    %550 = vmatprep.subr.bf16.mxu0 0
    %551 = vmatpush1.bf16.msra.mxu0 %v396
    %552 = vmatprep.subr.bf16.mxu0 0
    %553 = vmatpush1.bf16.msra.mxu0 %v397
    %554 = vmatprep.subr.bf16.mxu0 0
    %555 = vmatpush1.bf16.msra.mxu0 %v398
    %556 = vmatprep.subr.bf16.mxu0 0
    %557 = vmatpush1.bf16.msra.mxu0 %v399
    %558 = vmatprep.subr.bf16.mxu0 0
    %559 = vmatpush1.bf16.msra.mxu0 %v400
    %560 = vmatprep.subr.bf16.mxu0 0
    %561 = vmatpush1.bf16.msra.mxu0 %v401
    %562 = vmatprep.subr.bf16.mxu0 0
    %563 = vmatpush1.bf16.msra.mxu0 %v402
    %564 = vmatprep.subr.bf16.mxu0 0
    %565 = vmatpush1.bf16.msra.mxu0 %v403
    %566 = vmatprep.subr.bf16.mxu0 0
    %567 = vmatpush1.bf16.msra.mxu0 %v404
    %568 = vmatprep.subr.bf16.mxu0 0
    %569 = vmatpush1.bf16.msra.mxu0 %v405
    %570 = vmatprep.subr.bf16.mxu0 0
    %571 = vmatpush1.bf16.msra.mxu0 %v406
    %572 = vmatprep.subr.bf16.mxu0 0
    %573 = vmatpush1.bf16.msra.mxu0 %v407
    %574 = vmatprep.mubr.bf16.mxu0 %v57
    %575 = vmatmul.mubr.bf16.gmra.mrb[0].mxu0 %v56
    %v576 = vpop.f32.mrb[0].mxu0
    %v577 = vadd.f32 %v537, %v576
    %v578 = vpop.f32.mrb[0].mxu0
    %v579 = vpop.f32.mrb[0].mxu0
    %v580 = vpop.f32.mrb[0].mxu0
    %581 = vdwg.mxu0
    %582 = vmatprep.subr.bf16.mxu0 0
    %583 = vmatpush1.bf16.msra.mxu0 %v408
    %584 = vmatprep.subr.bf16.mxu0 0
    %585 = vmatpush1.bf16.msra.mxu0 0
    %586 = vmatprep.subr.bf16.mxu0 0
    %587 = vmatpush1.bf16.msra.mxu0 0
    %588 = vmatprep.subr.bf16.mxu0 0
    %589 = vmatpush1.bf16.msra.mxu0 0
    %590 = vmatprep.subr.bf16.mxu0 0
    %591 = vmatpush1.bf16.msra.mxu0 0
    %592 = vmatprep.subr.bf16.mxu0 0
    %593 = vmatpush1.bf16.msra.mxu0 0
    %594 = vmatprep.subr.bf16.mxu0 0
    %595 = vmatpush1.bf16.msra.mxu0 0
    %596 = vmatprep.subr.bf16.mxu0 0
    %597 = vmatpush1.bf16.msra.mxu0 0
    %598 = vmatprep.subr.bf16.mxu0 0
    %599 = vmatpush1.bf16.msra.mxu0 0
    %600 = vmatprep.subr.bf16.mxu0 0
    %601 = vmatpush1.bf16.msra.mxu0 0
    %602 = vmatprep.subr.bf16.mxu0 0
    %603 = vmatpush1.bf16.msra.mxu0 0
    %604 = vmatprep.subr.bf16.mxu0 0
    %605 = vmatpush1.bf16.msra.mxu0 0
    %606 = vmatprep.subr.bf16.mxu0 0
    %607 = vmatpush1.bf16.msra.mxu0 0
    %608 = vmatprep.subr.bf16.mxu0 0
    %609 = vmatpush1.bf16.msra.mxu0 0
    %610 = vmatprep.subr.bf16.mxu0 0
    %611 = vmatpush1.bf16.msra.mxu0 0
    %612 = vmatprep.subr.bf16.mxu0 0
    %613 = vmatpush1.bf16.msra.mxu0 0
    %614 = vmatprep.mubr.bf16.mxu0 0
    %615 = vmatmul.mubr.bf16.gmra.mrb[0].mxu0 %v460
    %v616 = vpop.f32.mrb[0].mxu0
    %v617 = vadd.f32 %v577, %v616
    %v618 = vpop.f32.mrb[0].mxu0
    %v619 = vpop.f32.mrb[0].mxu0
    %v620 = vpop.f32.mrb[0].mxu0
    %621 = vdwg.mxu0
    %vm622 = vcmask 80896
    %623 = vst.msk [vmem:[#allocation7] sm:$0xff] %vm622, %v617
    %624 = vmax.xlane.f32.xlu0 %v617
    %v625 = vpop.xlane.xlu0 %624
    %v626 = vsub.f32 %v617, %v625
    %v627 = vmul.f32 %v626, 1.442695
    %v628 = vpow.pop %v627
    %629 = vadd.xlane.f32.xlu0 %v628
    %v630 = vpop.xlane.xlu0 %629
    %v631 = vrcp.pop %v630
    %v632 = vmul.f32 %v628, %v631
    %633 = vst.msk [vmem:[#allocation8] sm:$0xff] %vm622, %v632
    // Predicated region
    $region22: #{softmax_classifier_forward.1} parent=1 // pred_check
      _
    $region23: #{softmax_classifier_forward.1} parent=1 // pred_check_branch
      %635 = sbr.rel (0) target = $region25
    $region24: #{softmax_classifier_forward.1} parent=1 // pred_region
      %s637 = ssub.s32 128, 128
      %638 = vsyncadd [#allocation4], %s637
      %s640 = sshll.u32 [#allocation7], 4
      %s641 = int_to_ptr.vmem [resolvable:$true] %s640
      %643 = dma.vmem_to_hbm [thread:$0]  %s641, 128, %s3, [#allocation4]
    $region25: #{softmax_classifier_forward.1} parent=1 // pred_fallthru
      _
    // Predicated region
    $region26: #{softmax_classifier_forward.1} parent=1 // pred_check
      _
    $region27: #{softmax_classifier_forward.1} parent=1 // pred_check_branch
      %645 = sbr.rel (0) target = $region29
    $region28: #{softmax_classifier_forward.1} parent=1 // pred_region
      %s647 = ssub.s32 128, 128
      %648 = vsyncadd [#allocation9], %s647
      %s650 = sshll.u32 [#allocation8], 4
      %s651 = int_to_ptr.vmem [resolvable:$true] %s650
      %653 = dma.vmem_to_hbm [thread:$0]  %s651, 128, %s4, [#allocation9]
    $region29: #{softmax_classifier_forward.1} parent=1 // pred_fallthru
      _
    // Predicated region
    $region30: #{softmax_classifier_forward.1} parent=1 // pred_check
      _
    $region31: #{softmax_classifier_forward.1} parent=1 // pred_check_branch
      %655 = sbr.rel (0) target = $region33
    $region32: #{softmax_classifier_forward.1} parent=1 // pred_region
      %656 = dma.done [#allocation4], 128
    $region33: #{softmax_classifier_forward.1} parent=1 // pred_fallthru
      _
    // Predicated region
    $region34: #{softmax_classifier_forward.1} parent=1 // pred_check
      _
    $region35: #{softmax_classifier_forward.1} parent=1 // pred_check_branch
      %658 = sbr.rel (0) target = $region37
    $region36: #{softmax_classifier_forward.1} parent=1 // pred_region
      %659 = dma.done [#allocation9], 128
    $region37: #{softmax_classifier_forward.1} parent=1 // pred_fallthru
      _
    %660 = vsyncpa [#allocation3], 1
    %661 = vsyncpa [#allocation6], 1
    %662 = vsyncpa [#allocation4], 1
    %663 = vsyncpa [#allocation9], 1

</llo_original>
